<compile_context>
chip_gen: v5e
topology: v5e:2x2
jax: 0.10.0
libtpu: 0.0.40
codegen_flags: <defaults>
</compile_context>

<pallas_src>
import jax
import jax.numpy as jnp
from jax.experimental import pallas as pl
from jax.experimental.pallas import tpu as pltpu

LANE = 128


def _round_up(x, m):
    return ((x + m - 1) // m) * m


def _entity_mlp_kernel(idx_ref, w1f_ref, bias_ref, w2_ref, o_ref):
    """Fused embedding gather + 2-layer MLP (embedding pre-folded into W1f).

    idx_ref:  (BT, L)      int32  word indices for this batch tile
    w1f_ref:  (L*Vp, Hp)   bf16   folded  emb @ W1  (vocab padded to Vp, hidden to Hp)
    bias_ref: (2, BW)      f32    row 0 = b1 (padded to Hp), row 1 = b2 (first O lanes)
    w2_ref:   (Hp, O)      f32    second Linear weight (in, out), output dim unpadded
    o_ref:    (BT, O)      f32    output tile (unpadded -> no wrapper slice)
    """
    BT, L = idx_ref.shape
    LVp, Hp = w1f_ref.shape
    Vp = LVp // L
    O = o_ref.shape[1]

    idx = idx_ref[...]                                   # (BT, L) int32
    bias = bias_ref[...]                                 # (2, BW) f32

    iota_v = jax.lax.broadcasted_iota(jnp.int32, (BT, Vp), 1)

    # Hidden accumulator with b1 folded into the init; f32 accumulation.
    # Per-position one-hot "gather" fused with the first Linear: each iteration
    # is a single bf16 MXU matmul against a Vp-aligned static slice of W1f, so
    # Mosaic can chain the accumulation in the MXU result path (MRF / MRB).
    # (Equivalently this could be one K = L*Vp matmul on a concatenated one-hot.)
    h = jnp.broadcast_to(bias[0:1, :Hp], (BT, Hp))
    for l in range(L):
        onehot_l = (idx[:, l:l + 1] == iota_v).astype(w1f_ref.dtype)   # (BT, Vp) bf16, exact
        h = h + jnp.dot(onehot_l, w1f_ref[l * Vp:(l + 1) * Vp, :],
                        preferred_element_type=jnp.float32)            # (BT, Hp)
    h = jnp.maximum(h, 0.0)                                            # ReLU

    # Second Linear: f32 weights, unpadded output dim.
    y = jnp.broadcast_to(bias[1:2, :O], (BT, O)) + jnp.dot(
        h, w2_ref[...], preferred_element_type=jnp.float32)
    o_ref[...] = y.astype(o_ref.dtype)


def pack_params(params, w1_dtype=jnp.bfloat16):
    """One-time repack: fold embedding into W1, zero-pad to lane-dense shapes,
    cast the big matmul weight to bf16.  Done outside the hot path."""
    emb = params["embedding"].astype(jnp.float32)     # (V, E)
    w1 = params["w1"].astype(jnp.float32)             # (L*E, H)   (in, out) layout
    b1 = params["b1"].astype(jnp.float32)             # (1, H)
    w2 = params["w2"].astype(jnp.float32)             # (H, O)
    b2 = params["b2"].astype(jnp.float32)             # (1, O)

    V, E = emb.shape
    D_in, H = w1.shape
    L = D_in // E
    O = w2.shape[1]

    Vp = _round_up(V, LANE)
    Hp = _round_up(H, LANE)
    BW = max(Hp, _round_up(O, LANE))

    emb_p = jnp.zeros((Vp, E), jnp.float32).at[:V, :].set(emb)

    # Fold: W1f[l, v, :] = emb_p[v, :] @ W1[l*E:(l+1)*E, :]
    w1_leh = w1.reshape(L, E, H)
    w1f = jnp.einsum("ve,leh->lvh", emb_p, w1_leh)                    # (L, Vp, H)
    w1f_p = jnp.zeros((L, Vp, Hp), jnp.float32).at[:, :, :H].set(w1f)
    w1f_p = w1f_p.reshape(L * Vp, Hp).astype(w1_dtype)                # (L*Vp, Hp) bf16

    w2_p = jnp.zeros((Hp, O), jnp.float32).at[:H, :].set(w2)          # padded hidden rows = 0
    bias = jnp.zeros((2, BW), jnp.float32)
    bias = bias.at[0, :H].set(b1[0])
    bias = bias.at[1, :O].set(b2[0])
    return {"w1f": w1f_p, "w2": w2_p, "bias": bias, "L": L, "Vp": Vp}


def _choose_bt(B):
    # One fat grid step amortizes the ~0.35us per-step overhead; total operand
    # footprint is <1 MiB so VMEM is never the constraint (incl. v7x's 64 MiB).
    if B <= 512:
        return B
    # Large batch: 256-row multiples fill v6e/v7x's 256-wide MXU M dimension
    # (and remain 128-multiples for v5e); >=2 parallel steps so v7x's two
    # TensorCores both get work.
    return min(_round_up(pl.cdiv(B, 2), 256), 2048)


def entity_predictor_forward(word_indices, packed):
    """word_indices: (B, L) int32.  Returns (B, output_dim) float32."""
    w1f = packed["w1f"]
    w2 = packed["w2"]
    bias = packed["bias"]
    L = packed["L"]

    word_indices = word_indices.astype(jnp.int32)
    B, Lw = word_indices.shape
    assert Lw == L, "word_indices length inconsistent with packed weights"

    LVp, Hp = w1f.shape
    O = w2.shape[1]
    BW = bias.shape[1]

    BT = _choose_bt(B)
    grid = (pl.cdiv(B, BT),)

    vmem = pltpu.MemorySpace.VMEM
    flops = 2 * B * (LVp * Hp + Hp * O)
    bytes_accessed = (4 * B * L + w1f.dtype.itemsize * LVp * Hp
                      + 4 * 2 * BW + 4 * Hp * O + 4 * B * O)

    out = pl.pallas_call(
        _entity_mlp_kernel,
        out_shape=jax.ShapeDtypeStruct((B, O), jnp.float32),
        grid=grid,
        in_specs=[
            pl.BlockSpec((BT, L), lambda i: (i, 0), memory_space=vmem),
            pl.BlockSpec((LVp, Hp), lambda i: (0, 0), memory_space=vmem),
            pl.BlockSpec((2, BW), lambda i: (0, 0), memory_space=vmem),
            pl.BlockSpec((Hp, O), lambda i: (0, 0), memory_space=vmem),
        ],
        out_specs=pl.BlockSpec((BT, O), lambda i: (i, 0), memory_space=vmem),
        compiler_params=pltpu.CompilerParams(dimension_semantics=("parallel",)),
        cost_estimate=pl.CostEstimate(
            flops=int(flops), transcendentals=0, bytes_accessed=int(bytes_accessed)),
    )(word_indices, w1f, bias, w2)

    return out


def init_params(key, vocabulary_size, embedding_dim, hidden_dim, output_dim, p, s):
    L = p + s + 1
    input_dim = L * embedding_dim
    k_emb, k_w1, k_b1, k_w2, k_b2 = jax.random.split(key, 5)
    emb = jax.random.normal(k_emb, (vocabulary_size, embedding_dim), jnp.float32)
    lim1 = 1.0 / (input_dim ** 0.5)
    lim2 = 1.0 / (hidden_dim ** 0.5)
    w1 = jax.random.uniform(k_w1, (input_dim, hidden_dim), jnp.float32, -lim1, lim1)
    b1 = jax.random.uniform(k_b1, (1, hidden_dim), jnp.float32, -lim1, lim1)
    w2 = jax.random.uniform(k_w2, (hidden_dim, output_dim), jnp.float32, -lim2, lim2)
    b2 = jax.random.uniform(k_b2, (1, output_dim), jnp.float32, -lim2, lim2)
    return {"embedding": emb, "w1": w1, "b1": b1, "w2": w2, "b2": b2}


def reference_forward(word_indices, params):
    emb = jnp.take(params["embedding"], word_indices, axis=0)
    x = emb.reshape(word_indices.shape[0], -1)
    h = jnp.maximum(x @ params["w1"] + params["b1"], 0.0)
    return h @ params["w2"] + params["b2"]


if __name__ == "__main__":
    # Small, module-consistent shapes.
    vocabulary_size = 100
    embedding_dim = 16
    hidden_dim = 32
    output_dim = 8
    p, s = 3, 4                    # -> L = p + s + 1 = 8, input_dim = 128
    batch = 8

    key = jax.random.PRNGKey(0)
    k_params, k_idx = jax.random.split(key)
    params = init_params(k_params, vocabulary_size, embedding_dim,
                         hidden_dim, output_dim, p, s)
    # Note: like the one-hot gather, indices are assumed in [0, vocabulary_size).
    word_indices = jax.random.randint(
        k_idx, (batch, p + s + 1), 0, vocabulary_size, dtype=jnp.int32)

    packed = pack_params(params)           # one-time fold + lane-dense repack (bf16 W1f)
    out = entity_predictor_forward(word_indices, packed)
    out = jax.block_until_ready(out)

    ref = reference_forward(word_indices, params)
    assert out.shape == (batch, output_dim)
    # W1f is bf16 (f32 accumulation), so tolerance vs the f32 reference is ~1e-3
    # relative; use a comfortably loose bound.
    assert jnp.allclose(out, ref, atol=1e-2, rtol=1e-2), "mismatch vs JAX reference"

    print("KERNEL_OK")
</pallas_src>

<mosaic_0001>
module attributes {stable_mosaic.version = 11 : i64} {
  func.func @_entity_mlp_kernel(%arg0: i32, %arg1: memref<8x8xi32, #tpu.memory_space<vmem>>, %arg2: memref<1024x128xbf16, #tpu.memory_space<vmem>>, %arg3: memref<2x128xf32, #tpu.memory_space<vmem>>, %arg4: memref<128x8xf32, #tpu.memory_space<vmem>>, %arg5: memref<8x8xf32, #tpu.memory_space<vmem>>) attributes {dimension_semantics = [#tpu.dimension_semantics<parallel>], iteration_bounds = array<i64: 1>, scalar_prefetch = 0 : i64, scratch_operands = 0 : i64, tpu.core_type = #tpu.core_type<tc>, window_params = [{transform_indices = @transform_0, window_bounds = array<i64: 8, 8>}, {pipeline_mode = #tpu.pipeline_mode<synchronous>, transform_indices = @transform_1, window_bounds = array<i64: 1024, 128>}, {pipeline_mode = #tpu.pipeline_mode<synchronous>, transform_indices = @transform_2, window_bounds = array<i64: 2, 128>}, {pipeline_mode = #tpu.pipeline_mode<synchronous>, transform_indices = @transform_3, window_bounds = array<i64: 128, 8>}, {transform_indices = @transform_4, window_bounds = array<i64: 8, 8>}]} {
    %c0 = arith.constant 0 : index
    %c0_0 = arith.constant 0 : index
    %0 = vector.load %arg1[%c0, %c0_0] : memref<8x8xi32, #tpu.memory_space<vmem>>, vector<8x8xi32>
    %c0_1 = arith.constant 0 : index
    %c0_2 = arith.constant 0 : index
    %1 = vector.load %arg3[%c0_1, %c0_2] : memref<2x128xf32, #tpu.memory_space<vmem>>, vector<2x128xf32>
    %2 = tpu.iota {dimensions = array<i32: 1>} : vector<8x128xi32>
    %3 = vector.extract_strided_slice %1 {offsets = [0, 0], sizes = [1, 128], strides = [1, 1]} : vector<2x128xf32> to vector<1x128xf32>
    %4 = vector.shape_cast %3 : vector<1x128xf32> to vector<1x128xf32>
    %5 = vector.broadcast %4 : vector<1x128xf32> to vector<8x128xf32>
    %6 = vector.extract_strided_slice %0 {offsets = [0, 0], sizes = [8, 1], strides = [1, 1]} : vector<8x8xi32> to vector<8x1xi32>
    %7 = vector.broadcast %6 : vector<8x1xi32> to vector<8x128xi32>
    %8 = arith.cmpi eq, %7, %2 : vector<8x128xi32>
    %9 = arith.extui %8 : vector<8x128xi1> to vector<8x128xi32>
    %10 = arith.sitofp %9 : vector<8x128xi32> to vector<8x128xf32>
    %11 = arith.truncf %10 : vector<8x128xf32> to vector<8x128xbf16>
    %c0_3 = arith.constant 0 : index
    %c0_4 = arith.constant 0 : index
    %12 = vector.load %arg2[%c0_3, %c0_4] : memref<1024x128xbf16, #tpu.memory_space<vmem>>, vector<128x128xbf16>
    %cst = arith.constant dense<0.000000e+00> : vector<8x128xf32>
    %13 = tpu.matmul %11, %12, %cst {dimension_numbers = #tpu.dot_dimension_numbers<[1], [0], [0], [1], [0, 0, 1, 1], [], []>} : vector<8x128xbf16>, vector<128x128xbf16>, vector<8x128xf32> -> vector<8x128xf32>
    %14 = arith.addf %5, %13 : vector<8x128xf32>
    %15 = vector.extract_strided_slice %0 {offsets = [0, 1], sizes = [8, 1], strides = [1, 1]} : vector<8x8xi32> to vector<8x1xi32>
    %16 = vector.broadcast %15 : vector<8x1xi32> to vector<8x128xi32>
    %17 = arith.cmpi eq, %16, %2 : vector<8x128xi32>
    %18 = arith.extui %17 : vector<8x128xi1> to vector<8x128xi32>
    %19 = arith.sitofp %18 : vector<8x128xi32> to vector<8x128xf32>
    %20 = arith.truncf %19 : vector<8x128xf32> to vector<8x128xbf16>
    %c128 = arith.constant 128 : index
    %c0_5 = arith.constant 0 : index
    %21 = vector.load %arg2[%c128, %c0_5] : memref<1024x128xbf16, #tpu.memory_space<vmem>>, vector<128x128xbf16>
    %cst_6 = arith.constant dense<0.000000e+00> : vector<8x128xf32>
    %22 = tpu.matmul %20, %21, %cst_6 {dimension_numbers = #tpu.dot_dimension_numbers<[1], [0], [0], [1], [0, 0, 1, 1], [], []>} : vector<8x128xbf16>, vector<128x128xbf16>, vector<8x128xf32> -> vector<8x128xf32>
    %23 = arith.addf %14, %22 : vector<8x128xf32>
    %24 = vector.extract_strided_slice %0 {offsets = [0, 2], sizes = [8, 1], strides = [1, 1]} : vector<8x8xi32> to vector<8x1xi32>
    %25 = vector.broadcast %24 : vector<8x1xi32> to vector<8x128xi32>
    %26 = arith.cmpi eq, %25, %2 : vector<8x128xi32>
    %27 = arith.extui %26 : vector<8x128xi1> to vector<8x128xi32>
    %28 = arith.sitofp %27 : vector<8x128xi32> to vector<8x128xf32>
    %29 = arith.truncf %28 : vector<8x128xf32> to vector<8x128xbf16>
    %c256 = arith.constant 256 : index
    %c0_7 = arith.constant 0 : index
    %30 = vector.load %arg2[%c256, %c0_7] : memref<1024x128xbf16, #tpu.memory_space<vmem>>, vector<128x128xbf16>
    %cst_8 = arith.constant dense<0.000000e+00> : vector<8x128xf32>
    %31 = tpu.matmul %29, %30, %cst_8 {dimension_numbers = #tpu.dot_dimension_numbers<[1], [0], [0], [1], [0, 0, 1, 1], [], []>} : vector<8x128xbf16>, vector<128x128xbf16>, vector<8x128xf32> -> vector<8x128xf32>
    %32 = arith.addf %23, %31 : vector<8x128xf32>
    %33 = vector.extract_strided_slice %0 {offsets = [0, 3], sizes = [8, 1], strides = [1, 1]} : vector<8x8xi32> to vector<8x1xi32>
    %34 = vector.broadcast %33 : vector<8x1xi32> to vector<8x128xi32>
    %35 = arith.cmpi eq, %34, %2 : vector<8x128xi32>
    %36 = arith.extui %35 : vector<8x128xi1> to vector<8x128xi32>
    %37 = arith.sitofp %36 : vector<8x128xi32> to vector<8x128xf32>
    %38 = arith.truncf %37 : vector<8x128xf32> to vector<8x128xbf16>
    %c384 = arith.constant 384 : index
    %c0_9 = arith.constant 0 : index
    %39 = vector.load %arg2[%c384, %c0_9] : memref<1024x128xbf16, #tpu.memory_space<vmem>>, vector<128x128xbf16>
    %cst_10 = arith.constant dense<0.000000e+00> : vector<8x128xf32>
    %40 = tpu.matmul %38, %39, %cst_10 {dimension_numbers = #tpu.dot_dimension_numbers<[1], [0], [0], [1], [0, 0, 1, 1], [], []>} : vector<8x128xbf16>, vector<128x128xbf16>, vector<8x128xf32> -> vector<8x128xf32>
    %41 = arith.addf %32, %40 : vector<8x128xf32>
    %42 = vector.extract_strided_slice %0 {offsets = [0, 4], sizes = [8, 1], strides = [1, 1]} : vector<8x8xi32> to vector<8x1xi32>
    %43 = vector.broadcast %42 : vector<8x1xi32> to vector<8x128xi32>
    %44 = arith.cmpi eq, %43, %2 : vector<8x128xi32>
    %45 = arith.extui %44 : vector<8x128xi1> to vector<8x128xi32>
    %46 = arith.sitofp %45 : vector<8x128xi32> to vector<8x128xf32>
    %47 = arith.truncf %46 : vector<8x128xf32> to vector<8x128xbf16>
    %c512 = arith.constant 512 : index
    %c0_11 = arith.constant 0 : index
    %48 = vector.load %arg2[%c512, %c0_11] : memref<1024x128xbf16, #tpu.memory_space<vmem>>, vector<128x128xbf16>
    %cst_12 = arith.constant dense<0.000000e+00> : vector<8x128xf32>
    %49 = tpu.matmul %47, %48, %cst_12 {dimension_numbers = #tpu.dot_dimension_numbers<[1], [0], [0], [1], [0, 0, 1, 1], [], []>} : vector<8x128xbf16>, vector<128x128xbf16>, vector<8x128xf32> -> vector<8x128xf32>
    %50 = arith.addf %41, %49 : vector<8x128xf32>
    %51 = vector.extract_strided_slice %0 {offsets = [0, 5], sizes = [8, 1], strides = [1, 1]} : vector<8x8xi32> to vector<8x1xi32>
    %52 = vector.broadcast %51 : vector<8x1xi32> to vector<8x128xi32>
    %53 = arith.cmpi eq, %52, %2 : vector<8x128xi32>
    %54 = arith.extui %53 : vector<8x128xi1> to vector<8x128xi32>
    %55 = arith.sitofp %54 : vector<8x128xi32> to vector<8x128xf32>
    %56 = arith.truncf %55 : vector<8x128xf32> to vector<8x128xbf16>
    %c640 = arith.constant 640 : index
    %c0_13 = arith.constant 0 : index
    %57 = vector.load %arg2[%c640, %c0_13] : memref<1024x128xbf16, #tpu.memory_space<vmem>>, vector<128x128xbf16>
    %cst_14 = arith.constant dense<0.000000e+00> : vector<8x128xf32>
    %58 = tpu.matmul %56, %57, %cst_14 {dimension_numbers = #tpu.dot_dimension_numbers<[1], [0], [0], [1], [0, 0, 1, 1], [], []>} : vector<8x128xbf16>, vector<128x128xbf16>, vector<8x128xf32> -> vector<8x128xf32>
    %59 = arith.addf %50, %58 : vector<8x128xf32>
    %60 = vector.extract_strided_slice %0 {offsets = [0, 6], sizes = [8, 1], strides = [1, 1]} : vector<8x8xi32> to vector<8x1xi32>
    %61 = vector.broadcast %60 : vector<8x1xi32> to vector<8x128xi32>
    %62 = arith.cmpi eq, %61, %2 : vector<8x128xi32>
    %63 = arith.extui %62 : vector<8x128xi1> to vector<8x128xi32>
    %64 = arith.sitofp %63 : vector<8x128xi32> to vector<8x128xf32>
    %65 = arith.truncf %64 : vector<8x128xf32> to vector<8x128xbf16>
    %c768 = arith.constant 768 : index
    %c0_15 = arith.constant 0 : index
    %66 = vector.load %arg2[%c768, %c0_15] : memref<1024x128xbf16, #tpu.memory_space<vmem>>, vector<128x128xbf16>
    %cst_16 = arith.constant dense<0.000000e+00> : vector<8x128xf32>
    %67 = tpu.matmul %65, %66, %cst_16 {dimension_numbers = #tpu.dot_dimension_numbers<[1], [0], [0], [1], [0, 0, 1, 1], [], []>} : vector<8x128xbf16>, vector<128x128xbf16>, vector<8x128xf32> -> vector<8x128xf32>
    %68 = arith.addf %59, %67 : vector<8x128xf32>
    %69 = vector.extract_strided_slice %0 {offsets = [0, 7], sizes = [8, 1], strides = [1, 1]} : vector<8x8xi32> to vector<8x1xi32>
    %70 = vector.broadcast %69 : vector<8x1xi32> to vector<8x128xi32>
    %71 = arith.cmpi eq, %70, %2 : vector<8x128xi32>
    %72 = arith.extui %71 : vector<8x128xi1> to vector<8x128xi32>
    %73 = arith.sitofp %72 : vector<8x128xi32> to vector<8x128xf32>
    %74 = arith.truncf %73 : vector<8x128xf32> to vector<8x128xbf16>
    %c896 = arith.constant 896 : index
    %c0_17 = arith.constant 0 : index
    %75 = vector.load %arg2[%c896, %c0_17] : memref<1024x128xbf16, #tpu.memory_space<vmem>>, vector<128x128xbf16>
    %cst_18 = arith.constant dense<0.000000e+00> : vector<8x128xf32>
    %76 = tpu.matmul %74, %75, %cst_18 {dimension_numbers = #tpu.dot_dimension_numbers<[1], [0], [0], [1], [0, 0, 1, 1], [], []>} : vector<8x128xbf16>, vector<128x128xbf16>, vector<8x128xf32> -> vector<8x128xf32>
    %77 = arith.addf %68, %76 : vector<8x128xf32>
    %cst_19 = arith.constant 0.000000e+00 : f32
    %78 = vector.broadcast %cst_19 : f32 to vector<8x128xf32>
    %79 = arith.maximumf %77, %78 : vector<8x128xf32>
    %80 = vector.extract_strided_slice %1 {offsets = [1, 0], sizes = [1, 8], strides = [1, 1]} : vector<2x128xf32> to vector<1x8xf32>
    %81 = vector.shape_cast %80 : vector<1x8xf32> to vector<1x8xf32>
    %82 = vector.broadcast %81 : vector<1x8xf32> to vector<8x8xf32>
    %c0_20 = arith.constant 0 : index
    %c0_21 = arith.constant 0 : index
    %83 = vector.load %arg4[%c0_20, %c0_21] : memref<128x8xf32, #tpu.memory_space<vmem>>, vector<128x8xf32>
    %cst_22 = arith.constant dense<0.000000e+00> : vector<8x8xf32>
    %84 = tpu.matmul %79, %83, %cst_22 {dimension_numbers = #tpu.dot_dimension_numbers<[1], [0], [0], [1], [0, 0, 1, 1], [], []>} : vector<8x128xf32>, vector<128x8xf32>, vector<8x8xf32> -> vector<8x8xf32>
    %85 = arith.addf %82, %84 : vector<8x8xf32>
    %c0_23 = arith.constant 0 : index
    %c0_24 = arith.constant 0 : index
    %86 = vector.load %arg5[%c0_23, %c0_24] : memref<8x8xf32, #tpu.memory_space<vmem>>, vector<8x8xf32>
    tpu.vector_store %arg5[%c0_23, %c0_24], %85 {strides = array<i32>} : memref<8x8xf32, #tpu.memory_space<vmem>>, vector<8x8xf32>,
    return
  }
  func.func @transform_0(%arg0: i32) -> (i32, i32) {
    %c0_i32 = arith.constant 0 : i32
    %c0_i32_0 = arith.constant 0 : i32
    return %arg0, %c0_i32 : i32, i32
  }
  func.func @transform_1(%arg0: i32) -> (i32, i32) {
    %c0_i32 = arith.constant 0 : i32
    %c0_i32_0 = arith.constant 0 : i32
    %c0_i32_1 = arith.constant 0 : i32
    return %c0_i32, %c0_i32_0 : i32, i32
  }
  func.func @transform_2(%arg0: i32) -> (i32, i32) {
    %c0_i32 = arith.constant 0 : i32
    %c0_i32_0 = arith.constant 0 : i32
    %c0_i32_1 = arith.constant 0 : i32
    return %c0_i32, %c0_i32_0 : i32, i32
  }
  func.func @transform_3(%arg0: i32) -> (i32, i32) {
    %c0_i32 = arith.constant 0 : i32
    %c0_i32_0 = arith.constant 0 : i32
    %c0_i32_1 = arith.constant 0 : i32
    return %c0_i32, %c0_i32_0 : i32, i32
  }
  func.func @transform_4(%arg0: i32) -> (i32, i32) {
    %c0_i32 = arith.constant 0 : i32
    %c0_i32_0 = arith.constant 0 : i32
    return %arg0, %c0_i32 : i32, i32
  }
}

</mosaic_0001>

<llo_original>
// kernel: tpu_custom_call.1
$region0: #{tpu_custom_call.1}
  #allocation0 [shape = 'u32[]', space=smem, size = 0x4, offset = 0x4, fixed_abs, tag = 'smem constant byte address 0x4 - core index']
  #allocation1 [shape = 'u32[72,128]{1,0:T(1,128)}', space=vmem, size = 0x9000, scoped, tag = 'internal scratch']
  %s0 = inlined_call_operand.vmem [shape: s32[8,8], index: 0, kind: input, shape index: {}]
  %s1 = inlined_call_operand.hbm [shape: bf16[1024,128], index: 1, kind: input, shape index: {}]
  %s2 = inlined_call_operand.vmem [shape: f32[2,128], index: 2, kind: input, shape index: {}]
  %s3 = inlined_call_operand.vmem [shape: f32[128,8], index: 3, kind: input, shape index: {}]
  %s4 = inlined_call_operand.hbm [shape: f32[8,8], index: 4, kind: output, shape index: {}]
  %s5 = sld [smem:[#allocation0]]
  $region30: #{tpu_custom_call.1} parent=0
    _
  %s7 = ssub.s32 1, %s5
  %s8 = scalar_select 0, %s7, %s5
  $region1: #{tpu_custom_call.1} parent=0
    #allocation2 [shape = 'u8[262144]{0}', space=vmem, size = 0x40000, scoped, tag = 'input window, operand 1, single buffered']
    #allocation3 [shape = 's32[1]{0}', space=sflag, size = 0x4, scoped, tag = 'scoped memory for tpu_custom_call.1']
    #allocation4 [shape = 's32[1]{0}', space=sflag, size = 0x4, scoped, tag = 'scoped memory for tpu_custom_call.1']
    #allocation5 [shape = 'u8[4096]{0}', space=vmem, size = 0x1000, scoped, tag = 'output window, operand 0, single buffered']
    %9 = vsyncpa [#allocation3], 0
    %10 = vsyncpa [#allocation4], 0
    // Predicated region
    $region2: #{tpu_custom_call.1} parent=1 // pred_check
      _
    $region3: #{tpu_custom_call.1} parent=1 // pred_check_branch
      %12 = sbr.rel (0) target = $region5
    $region4: #{tpu_custom_call.1} parent=1 // pred_region
      _
    $region5: #{tpu_custom_call.1} parent=1 // pred_fallthru
      _
    // Predicated region
    $region6: #{tpu_custom_call.1} parent=1 // pred_check
      _
    $region7: #{tpu_custom_call.1} parent=1 // pred_check_branch
      %14 = sbr.rel (0) target = $region9
    $region8: #{tpu_custom_call.1} parent=1 // pred_region
      %16 = vsyncadd [#allocation3], 0
      %s17 = sshll.u32 %s1, 4
      %s18 = int_to_ptr.hbm [resolvable:$true] %s17
      %s19 = sshll.u32 [#allocation2], 4
      %s20 = int_to_ptr.vmem [resolvable:$true] %s19
      %25 = dma.hbm_to_vmem [thread:$0]  %s18, 8192, %s20, [#allocation3], 64, 64, 4
    $region9: #{tpu_custom_call.1} parent=1 // pred_fallthru
      _
    // Predicated region
    $region10: #{tpu_custom_call.1} parent=1 // pred_check
      _
    $region11: #{tpu_custom_call.1} parent=1 // pred_check_branch
      %27 = sbr.rel (0) target = $region13
    $region12: #{tpu_custom_call.1} parent=1 // pred_region
      _
    $region13: #{tpu_custom_call.1} parent=1 // pred_fallthru
      _
    // Predicated region
    $region14: #{tpu_custom_call.1} parent=1 // pred_check
      _
    $region15: #{tpu_custom_call.1} parent=1 // pred_check_branch
      %29 = sbr.rel (0) target = $region17
    $region16: #{tpu_custom_call.1} parent=1 // pred_region
      _
    $region17: #{tpu_custom_call.1} parent=1 // pred_fallthru
      _
    // Predicated region
    $region18: #{tpu_custom_call.1} parent=1 // pred_check
      _
    $region19: #{tpu_custom_call.1} parent=1 // pred_check_branch
      %31 = sbr.rel (0) target = $region21
    $region20: #{tpu_custom_call.1} parent=1 // pred_region
      %33 = dma.done [#allocation3], 8192
    $region21: #{tpu_custom_call.1} parent=1 // pred_fallthru
      _
    %v34 = vld [vmem:[%s0] sm:$0xff]
    %v35 = vld [vmem:[%s2] sm:$0x3]
    %v36 = vlaneseq
    %v37 = vand.u32 %v36, 127
    %v38 = vperm.slane %v35, 0
    %39 = vset.pattern.permute.xlu0 0
    %40 = vperm.xlu0 %39, %v34
    %v41 = vpop.permute.xlu0 %40
    %vm42 = vcmp.eq.s32.totalorder %v41, %v37
    %v43 = vsel %vm42, 1, 0
    %v44 = vcvt.s32.f32 %v43
    %v45 = vpack.c.bf16 %v44, %v44
    %v46 = vld [vmem:[#allocation2] sm:$0xf]
    %v47 = vld [vmem:[#allocation2 + $0x4] sm:$0xf]
    %v48 = vld [vmem:[#allocation2 + $0x8] sm:$0xf]
    %v49 = vld [vmem:[#allocation2 + $0xc] sm:$0xf]
    %v50 = vld [vmem:[#allocation2 + $0x10] sm:$0xf]
    %v51 = vld [vmem:[#allocation2 + $0x14] sm:$0xf]
    %v52 = vld [vmem:[#allocation2 + $0x18] sm:$0xf]
    %v53 = vld [vmem:[#allocation2 + $0x1c] sm:$0xf]
    %v54 = vld [vmem:[#allocation2 + $0x20] sm:$0xf]
    %v55 = vld [vmem:[#allocation2 + $0x24] sm:$0xf]
    %v56 = vld [vmem:[#allocation2 + $0x28] sm:$0xf]
    %v57 = vld [vmem:[#allocation2 + $0x2c] sm:$0xf]
    %v58 = vld [vmem:[#allocation2 + $0x30] sm:$0xf]
    %v59 = vld [vmem:[#allocation2 + $0x34] sm:$0xf]
    %v60 = vld [vmem:[#allocation2 + $0x38] sm:$0xf]
    %v61 = vld [vmem:[#allocation2 + $0x3c] sm:$0xf]
    %v78 = vunpack.c.l.b16 %v46
    %v79 = vunpack.c.l.b16 %v47
    %v80 = vunpack.c.l.b16 %v48
    %v81 = vunpack.c.l.b16 %v49
    %v82 = vunpack.c.l.b16 %v50
    %v83 = vunpack.c.l.b16 %v51
    %v84 = vunpack.c.l.b16 %v52
    %v85 = vunpack.c.l.b16 %v53
    %v86 = vunpack.c.l.b16 %v54
    %v87 = vunpack.c.l.b16 %v55
    %v88 = vunpack.c.l.b16 %v56
    %v89 = vunpack.c.l.b16 %v57
    %v90 = vunpack.c.l.b16 %v58
    %v91 = vunpack.c.l.b16 %v59
    %v92 = vunpack.c.l.b16 %v60
    %v93 = vunpack.c.l.b16 %v61
    %v94 = vpack.c.b16 %v79, %v78
    %v95 = vpack.c.b16 %v81, %v80
    %v96 = vpack.c.b16 %v83, %v82
    %v97 = vpack.c.b16 %v85, %v84
    %v98 = vpack.c.b16 %v87, %v86
    %v99 = vpack.c.b16 %v89, %v88
    %v100 = vpack.c.b16 %v91, %v90
    %v101 = vpack.c.b16 %v93, %v92
    %110 = vmatpush.bf16.msra.mxu0 %v101
    %111 = vmatpush.bf16.msra.mxu0 %v100
    %112 = vmatpush.bf16.msra.mxu0 %v99
    %113 = vmatpush.bf16.msra.mxu0 %v98
    %114 = vmatpush.bf16.msra.mxu0 %v97
    %115 = vmatpush.bf16.msra.mxu0 %v96
    %116 = vmatpush.bf16.msra.mxu0 %v95
    %117 = vmatpush.bf16.msra.mxu0 %v94
    %118 = vmatmul.bf16.gmra.mxu0 %v45
    %v119 = vpop.f32.mrf.mxu0
    %v120 = vadd.f32 0.0, %v119
    %v121 = vpop.f32.mrf.mxu0
    %122 = vdwg.mxu0
    %v123 = vadd.f32 %v38, %v120
    %124 = vset.pattern.permute.xlu0 1
    %125 = vperm.xlu0 %124, %v34
    %v126 = vpop.permute.xlu0 %125
    %vm127 = vcmp.eq.s32.totalorder %v126, %v37
    %v128 = vsel %vm127, 1, 0
    %v129 = vcvt.s32.f32 %v128
    %v130 = vpack.c.bf16 %v129, %v129
    %v131 = vld [vmem:[#allocation2 + $0x40] sm:$0xf]
    %v132 = vld [vmem:[#allocation2 + $0x44] sm:$0xf]
    %v133 = vld [vmem:[#allocation2 + $0x48] sm:$0xf]
    %v134 = vld [vmem:[#allocation2 + $0x4c] sm:$0xf]
    %v135 = vld [vmem:[#allocation2 + $0x50] sm:$0xf]
    %v136 = vld [vmem:[#allocation2 + $0x54] sm:$0xf]
    %v137 = vld [vmem:[#allocation2 + $0x58] sm:$0xf]
    %v138 = vld [vmem:[#allocation2 + $0x5c] sm:$0xf]
    %v139 = vld [vmem:[#allocation2 + $0x60] sm:$0xf]
    %v140 = vld [vmem:[#allocation2 + $0x64] sm:$0xf]
    %v141 = vld [vmem:[#allocation2 + $0x68] sm:$0xf]
    %v142 = vld [vmem:[#allocation2 + $0x6c] sm:$0xf]
    %v143 = vld [vmem:[#allocation2 + $0x70] sm:$0xf]
    %v144 = vld [vmem:[#allocation2 + $0x74] sm:$0xf]
    %v145 = vld [vmem:[#allocation2 + $0x78] sm:$0xf]
    %v146 = vld [vmem:[#allocation2 + $0x7c] sm:$0xf]
    %v163 = vunpack.c.l.b16 %v131
    %v164 = vunpack.c.l.b16 %v132
    %v165 = vunpack.c.l.b16 %v133
    %v166 = vunpack.c.l.b16 %v134
    %v167 = vunpack.c.l.b16 %v135
    %v168 = vunpack.c.l.b16 %v136
    %v169 = vunpack.c.l.b16 %v137
    %v170 = vunpack.c.l.b16 %v138
    %v171 = vunpack.c.l.b16 %v139
    %v172 = vunpack.c.l.b16 %v140
    %v173 = vunpack.c.l.b16 %v141
    %v174 = vunpack.c.l.b16 %v142
    %v175 = vunpack.c.l.b16 %v143
    %v176 = vunpack.c.l.b16 %v144
    %v177 = vunpack.c.l.b16 %v145
    %v178 = vunpack.c.l.b16 %v146
    %v179 = vpack.c.b16 %v164, %v163
    %v180 = vpack.c.b16 %v166, %v165
    %v181 = vpack.c.b16 %v168, %v167
    %v182 = vpack.c.b16 %v170, %v169
    %v183 = vpack.c.b16 %v172, %v171
    %v184 = vpack.c.b16 %v174, %v173
    %v185 = vpack.c.b16 %v176, %v175
    %v186 = vpack.c.b16 %v178, %v177
    %195 = vmatpush.bf16.msra.mxu0 %v186
    %196 = vmatpush.bf16.msra.mxu0 %v185
    %197 = vmatpush.bf16.msra.mxu0 %v184
    %198 = vmatpush.bf16.msra.mxu0 %v183
    %199 = vmatpush.bf16.msra.mxu0 %v182
    %200 = vmatpush.bf16.msra.mxu0 %v181
    %201 = vmatpush.bf16.msra.mxu0 %v180
    %202 = vmatpush.bf16.msra.mxu0 %v179
    %203 = vmatmul.bf16.gmra.mxu0 %v130
    %v204 = vpop.f32.mrf.mxu0
    %v205 = vadd.f32 0.0, %v204
    %v206 = vpop.f32.mrf.mxu0
    %207 = vdwg.mxu0
    %v208 = vadd.f32 %v123, %v205
    %209 = vset.pattern.permute.xlu0 2
    %210 = vperm.xlu0 %209, %v34
    %v211 = vpop.permute.xlu0 %210
    %vm212 = vcmp.eq.s32.totalorder %v211, %v37
    %v213 = vsel %vm212, 1, 0
    %v214 = vcvt.s32.f32 %v213
    %v215 = vpack.c.bf16 %v214, %v214
    %v216 = vld [vmem:[#allocation2 + $0x80] sm:$0xf]
    %v217 = vld [vmem:[#allocation2 + $0x84] sm:$0xf]
    %v218 = vld [vmem:[#allocation2 + $0x88] sm:$0xf]
    %v219 = vld [vmem:[#allocation2 + $0x8c] sm:$0xf]
    %v220 = vld [vmem:[#allocation2 + $0x90] sm:$0xf]
    %v221 = vld [vmem:[#allocation2 + $0x94] sm:$0xf]
    %v222 = vld [vmem:[#allocation2 + $0x98] sm:$0xf]
    %v223 = vld [vmem:[#allocation2 + $0x9c] sm:$0xf]
    %v224 = vld [vmem:[#allocation2 + $0xa0] sm:$0xf]
    %v225 = vld [vmem:[#allocation2 + $0xa4] sm:$0xf]
    %v226 = vld [vmem:[#allocation2 + $0xa8] sm:$0xf]
    %v227 = vld [vmem:[#allocation2 + $0xac] sm:$0xf]
    %v228 = vld [vmem:[#allocation2 + $0xb0] sm:$0xf]
    %v229 = vld [vmem:[#allocation2 + $0xb4] sm:$0xf]
    %v230 = vld [vmem:[#allocation2 + $0xb8] sm:$0xf]
    %v231 = vld [vmem:[#allocation2 + $0xbc] sm:$0xf]
    %v248 = vunpack.c.l.b16 %v216
    %v249 = vunpack.c.l.b16 %v217
    %v250 = vunpack.c.l.b16 %v218
    %v251 = vunpack.c.l.b16 %v219
    %v252 = vunpack.c.l.b16 %v220
    %v253 = vunpack.c.l.b16 %v221
    %v254 = vunpack.c.l.b16 %v222
    %v255 = vunpack.c.l.b16 %v223
    %v256 = vunpack.c.l.b16 %v224
    %v257 = vunpack.c.l.b16 %v225
    %v258 = vunpack.c.l.b16 %v226
    %v259 = vunpack.c.l.b16 %v227
    %v260 = vunpack.c.l.b16 %v228
    %v261 = vunpack.c.l.b16 %v229
    %v262 = vunpack.c.l.b16 %v230
    %v263 = vunpack.c.l.b16 %v231
    %v264 = vpack.c.b16 %v249, %v248
    %v265 = vpack.c.b16 %v251, %v250
    %v266 = vpack.c.b16 %v253, %v252
    %v267 = vpack.c.b16 %v255, %v254
    %v268 = vpack.c.b16 %v257, %v256
    %v269 = vpack.c.b16 %v259, %v258
    %v270 = vpack.c.b16 %v261, %v260
    %v271 = vpack.c.b16 %v263, %v262
    %280 = vmatpush.bf16.msra.mxu0 %v271
    %281 = vmatpush.bf16.msra.mxu0 %v270
    %282 = vmatpush.bf16.msra.mxu0 %v269
    %283 = vmatpush.bf16.msra.mxu0 %v268
    %284 = vmatpush.bf16.msra.mxu0 %v267
    %285 = vmatpush.bf16.msra.mxu0 %v266
    %286 = vmatpush.bf16.msra.mxu0 %v265
    %287 = vmatpush.bf16.msra.mxu0 %v264
    %288 = vmatmul.bf16.gmra.mxu0 %v215
    %v289 = vpop.f32.mrf.mxu0
    %v290 = vadd.f32 0.0, %v289
    %v291 = vpop.f32.mrf.mxu0
    %292 = vdwg.mxu0
    %v293 = vadd.f32 %v208, %v290
    %294 = vset.pattern.permute.xlu0 3
    %295 = vperm.xlu0 %294, %v34
    %v296 = vpop.permute.xlu0 %295
    %vm297 = vcmp.eq.s32.totalorder %v296, %v37
    %v298 = vsel %vm297, 1, 0
    %v299 = vcvt.s32.f32 %v298
    %v300 = vpack.c.bf16 %v299, %v299
    %v301 = vld [vmem:[#allocation2 + $0xc0] sm:$0xf]
    %v302 = vld [vmem:[#allocation2 + $0xc4] sm:$0xf]
    %v303 = vld [vmem:[#allocation2 + $0xc8] sm:$0xf]
    %v304 = vld [vmem:[#allocation2 + $0xcc] sm:$0xf]
    %v305 = vld [vmem:[#allocation2 + $0xd0] sm:$0xf]
    %v306 = vld [vmem:[#allocation2 + $0xd4] sm:$0xf]
    %v307 = vld [vmem:[#allocation2 + $0xd8] sm:$0xf]
    %v308 = vld [vmem:[#allocation2 + $0xdc] sm:$0xf]
    %v309 = vld [vmem:[#allocation2 + $0xe0] sm:$0xf]
    %v310 = vld [vmem:[#allocation2 + $0xe4] sm:$0xf]
    %v311 = vld [vmem:[#allocation2 + $0xe8] sm:$0xf]
    %v312 = vld [vmem:[#allocation2 + $0xec] sm:$0xf]
    %v313 = vld [vmem:[#allocation2 + $0xf0] sm:$0xf]
    %v314 = vld [vmem:[#allocation2 + $0xf4] sm:$0xf]
    %v315 = vld [vmem:[#allocation2 + $0xf8] sm:$0xf]
    %v316 = vld [vmem:[#allocation2 + $0xfc] sm:$0xf]
    %v333 = vunpack.c.l.b16 %v301
    %v334 = vunpack.c.l.b16 %v302
    %v335 = vunpack.c.l.b16 %v303
    %v336 = vunpack.c.l.b16 %v304
    %v337 = vunpack.c.l.b16 %v305
    %v338 = vunpack.c.l.b16 %v306
    %v339 = vunpack.c.l.b16 %v307
    %v340 = vunpack.c.l.b16 %v308
    %v341 = vunpack.c.l.b16 %v309
    %v342 = vunpack.c.l.b16 %v310
    %v343 = vunpack.c.l.b16 %v311
    %v344 = vunpack.c.l.b16 %v312
    %v345 = vunpack.c.l.b16 %v313
    %v346 = vunpack.c.l.b16 %v314
    %v347 = vunpack.c.l.b16 %v315
    %v348 = vunpack.c.l.b16 %v316
    %v349 = vpack.c.b16 %v334, %v333
    %v350 = vpack.c.b16 %v336, %v335
    %v351 = vpack.c.b16 %v338, %v337
    %v352 = vpack.c.b16 %v340, %v339
    %v353 = vpack.c.b16 %v342, %v341
    %v354 = vpack.c.b16 %v344, %v343
    %v355 = vpack.c.b16 %v346, %v345
    %v356 = vpack.c.b16 %v348, %v347
    %365 = vmatpush.bf16.msra.mxu0 %v356
    %366 = vmatpush.bf16.msra.mxu0 %v355
    %367 = vmatpush.bf16.msra.mxu0 %v354
    %368 = vmatpush.bf16.msra.mxu0 %v353
    %369 = vmatpush.bf16.msra.mxu0 %v352
    %370 = vmatpush.bf16.msra.mxu0 %v351
    %371 = vmatpush.bf16.msra.mxu0 %v350
    %372 = vmatpush.bf16.msra.mxu0 %v349
    %373 = vmatmul.bf16.gmra.mxu0 %v300
    %v374 = vpop.f32.mrf.mxu0
    %v375 = vadd.f32 0.0, %v374
    %v376 = vpop.f32.mrf.mxu0
    %377 = vdwg.mxu0
    %v378 = vadd.f32 %v293, %v375
    %379 = vset.pattern.permute.xlu0 4
    %380 = vperm.xlu0 %379, %v34
    %v381 = vpop.permute.xlu0 %380
    %vm382 = vcmp.eq.s32.totalorder %v381, %v37
    %v383 = vsel %vm382, 1, 0
    %v384 = vcvt.s32.f32 %v383
    %v385 = vpack.c.bf16 %v384, %v384
    %v386 = vld [vmem:[#allocation2 + $0x100] sm:$0xf]
    %v387 = vld [vmem:[#allocation2 + $0x104] sm:$0xf]
    %v388 = vld [vmem:[#allocation2 + $0x108] sm:$0xf]
    %v389 = vld [vmem:[#allocation2 + $0x10c] sm:$0xf]
    %v390 = vld [vmem:[#allocation2 + $0x110] sm:$0xf]
    %v391 = vld [vmem:[#allocation2 + $0x114] sm:$0xf]
    %v392 = vld [vmem:[#allocation2 + $0x118] sm:$0xf]
    %v393 = vld [vmem:[#allocation2 + $0x11c] sm:$0xf]
    %v394 = vld [vmem:[#allocation2 + $0x120] sm:$0xf]
    %v395 = vld [vmem:[#allocation2 + $0x124] sm:$0xf]
    %v396 = vld [vmem:[#allocation2 + $0x128] sm:$0xf]
    %v397 = vld [vmem:[#allocation2 + $0x12c] sm:$0xf]
    %v398 = vld [vmem:[#allocation2 + $0x130] sm:$0xf]
    %v399 = vld [vmem:[#allocation2 + $0x134] sm:$0xf]
    %v400 = vld [vmem:[#allocation2 + $0x138] sm:$0xf]
    %v401 = vld [vmem:[#allocation2 + $0x13c] sm:$0xf]
    %v418 = vunpack.c.l.b16 %v386
    %v419 = vunpack.c.l.b16 %v387
    %v420 = vunpack.c.l.b16 %v388
    %v421 = vunpack.c.l.b16 %v389
    %v422 = vunpack.c.l.b16 %v390
    %v423 = vunpack.c.l.b16 %v391
    %v424 = vunpack.c.l.b16 %v392
    %v425 = vunpack.c.l.b16 %v393
    %v426 = vunpack.c.l.b16 %v394
    %v427 = vunpack.c.l.b16 %v395
    %v428 = vunpack.c.l.b16 %v396
    %v429 = vunpack.c.l.b16 %v397
    %v430 = vunpack.c.l.b16 %v398
    %v431 = vunpack.c.l.b16 %v399
    %v432 = vunpack.c.l.b16 %v400
    %v433 = vunpack.c.l.b16 %v401
    %v434 = vpack.c.b16 %v419, %v418
    %v435 = vpack.c.b16 %v421, %v420
    %v436 = vpack.c.b16 %v423, %v422
    %v437 = vpack.c.b16 %v425, %v424
    %v438 = vpack.c.b16 %v427, %v426
    %v439 = vpack.c.b16 %v429, %v428
    %v440 = vpack.c.b16 %v431, %v430
    %v441 = vpack.c.b16 %v433, %v432
    %450 = vmatpush.bf16.msra.mxu0 %v441
    %451 = vmatpush.bf16.msra.mxu0 %v440
    %452 = vmatpush.bf16.msra.mxu0 %v439
    %453 = vmatpush.bf16.msra.mxu0 %v438
    %454 = vmatpush.bf16.msra.mxu0 %v437
    %455 = vmatpush.bf16.msra.mxu0 %v436
    %456 = vmatpush.bf16.msra.mxu0 %v435
    %457 = vmatpush.bf16.msra.mxu0 %v434
    %458 = vmatmul.bf16.gmra.mxu0 %v385
    %v459 = vpop.f32.mrf.mxu0
    %v460 = vadd.f32 0.0, %v459
    %v461 = vpop.f32.mrf.mxu0
    %462 = vdwg.mxu0
    %v463 = vadd.f32 %v378, %v460
    %464 = vset.pattern.permute.xlu0 5
    %465 = vperm.xlu0 %464, %v34
    %v466 = vpop.permute.xlu0 %465
    %vm467 = vcmp.eq.s32.totalorder %v466, %v37
    %v468 = vsel %vm467, 1, 0
    %v469 = vcvt.s32.f32 %v468
    %v470 = vpack.c.bf16 %v469, %v469
    %v471 = vld [vmem:[#allocation2 + $0x140] sm:$0xf]
    %v472 = vld [vmem:[#allocation2 + $0x144] sm:$0xf]
    %v473 = vld [vmem:[#allocation2 + $0x148] sm:$0xf]
    %v474 = vld [vmem:[#allocation2 + $0x14c] sm:$0xf]
    %v475 = vld [vmem:[#allocation2 + $0x150] sm:$0xf]
    %v476 = vld [vmem:[#allocation2 + $0x154] sm:$0xf]
    %v477 = vld [vmem:[#allocation2 + $0x158] sm:$0xf]
    %v478 = vld [vmem:[#allocation2 + $0x15c] sm:$0xf]
    %v479 = vld [vmem:[#allocation2 + $0x160] sm:$0xf]
    %v480 = vld [vmem:[#allocation2 + $0x164] sm:$0xf]
    %v481 = vld [vmem:[#allocation2 + $0x168] sm:$0xf]
    %v482 = vld [vmem:[#allocation2 + $0x16c] sm:$0xf]
    %v483 = vld [vmem:[#allocation2 + $0x170] sm:$0xf]
    %v484 = vld [vmem:[#allocation2 + $0x174] sm:$0xf]
    %v485 = vld [vmem:[#allocation2 + $0x178] sm:$0xf]
    %v486 = vld [vmem:[#allocation2 + $0x17c] sm:$0xf]
    %v503 = vunpack.c.l.b16 %v471
    %v504 = vunpack.c.l.b16 %v472
    %v505 = vunpack.c.l.b16 %v473
    %v506 = vunpack.c.l.b16 %v474
    %v507 = vunpack.c.l.b16 %v475
    %v508 = vunpack.c.l.b16 %v476
    %v509 = vunpack.c.l.b16 %v477
    %v510 = vunpack.c.l.b16 %v478
    %v511 = vunpack.c.l.b16 %v479
    %v512 = vunpack.c.l.b16 %v480
    %v513 = vunpack.c.l.b16 %v481
    %v514 = vunpack.c.l.b16 %v482
    %v515 = vunpack.c.l.b16 %v483
    %v516 = vunpack.c.l.b16 %v484
    %v517 = vunpack.c.l.b16 %v485
    %v518 = vunpack.c.l.b16 %v486
    %v519 = vpack.c.b16 %v504, %v503
    %v520 = vpack.c.b16 %v506, %v505
    %v521 = vpack.c.b16 %v508, %v507
    %v522 = vpack.c.b16 %v510, %v509
    %v523 = vpack.c.b16 %v512, %v511
    %v524 = vpack.c.b16 %v514, %v513
    %v525 = vpack.c.b16 %v516, %v515
    %v526 = vpack.c.b16 %v518, %v517
    %535 = vmatpush.bf16.msra.mxu0 %v526
    %536 = vmatpush.bf16.msra.mxu0 %v525
    %537 = vmatpush.bf16.msra.mxu0 %v524
    %538 = vmatpush.bf16.msra.mxu0 %v523
    %539 = vmatpush.bf16.msra.mxu0 %v522
    %540 = vmatpush.bf16.msra.mxu0 %v521
    %541 = vmatpush.bf16.msra.mxu0 %v520
    %542 = vmatpush.bf16.msra.mxu0 %v519
    %543 = vmatmul.bf16.gmra.mxu0 %v470
    %v544 = vpop.f32.mrf.mxu0
    %v545 = vadd.f32 0.0, %v544
    %v546 = vpop.f32.mrf.mxu0
    %547 = vdwg.mxu0
    %v548 = vadd.f32 %v463, %v545
    %549 = vset.pattern.permute.xlu0 6
    %550 = vperm.xlu0 %549, %v34
    %v551 = vpop.permute.xlu0 %550
    %vm552 = vcmp.eq.s32.totalorder %v551, %v37
    %v553 = vsel %vm552, 1, 0
    %v554 = vcvt.s32.f32 %v553
    %v555 = vpack.c.bf16 %v554, %v554
    %v556 = vld [vmem:[#allocation2 + $0x180] sm:$0xf]
    %v557 = vld [vmem:[#allocation2 + $0x184] sm:$0xf]
    %v558 = vld [vmem:[#allocation2 + $0x188] sm:$0xf]
    %v559 = vld [vmem:[#allocation2 + $0x18c] sm:$0xf]
    %v560 = vld [vmem:[#allocation2 + $0x190] sm:$0xf]
    %v561 = vld [vmem:[#allocation2 + $0x194] sm:$0xf]
    %v562 = vld [vmem:[#allocation2 + $0x198] sm:$0xf]
    %v563 = vld [vmem:[#allocation2 + $0x19c] sm:$0xf]
    %v564 = vld [vmem:[#allocation2 + $0x1a0] sm:$0xf]
    %v565 = vld [vmem:[#allocation2 + $0x1a4] sm:$0xf]
    %v566 = vld [vmem:[#allocation2 + $0x1a8] sm:$0xf]
    %v567 = vld [vmem:[#allocation2 + $0x1ac] sm:$0xf]
    %v568 = vld [vmem:[#allocation2 + $0x1b0] sm:$0xf]
    %v569 = vld [vmem:[#allocation2 + $0x1b4] sm:$0xf]
    %v570 = vld [vmem:[#allocation2 + $0x1b8] sm:$0xf]
    %v571 = vld [vmem:[#allocation2 + $0x1bc] sm:$0xf]
    %v588 = vunpack.c.l.b16 %v556
    %v589 = vunpack.c.l.b16 %v557
    %v590 = vunpack.c.l.b16 %v558
    %v591 = vunpack.c.l.b16 %v559
    %v592 = vunpack.c.l.b16 %v560
    %v593 = vunpack.c.l.b16 %v561
    %v594 = vunpack.c.l.b16 %v562
    %v595 = vunpack.c.l.b16 %v563
    %v596 = vunpack.c.l.b16 %v564
    %v597 = vunpack.c.l.b16 %v565
    %v598 = vunpack.c.l.b16 %v566
    %v599 = vunpack.c.l.b16 %v567
    %v600 = vunpack.c.l.b16 %v568
    %v601 = vunpack.c.l.b16 %v569
    %v602 = vunpack.c.l.b16 %v570
    %v603 = vunpack.c.l.b16 %v571
    %v604 = vpack.c.b16 %v589, %v588
    %v605 = vpack.c.b16 %v591, %v590
    %v606 = vpack.c.b16 %v593, %v592
    %v607 = vpack.c.b16 %v595, %v594
    %v608 = vpack.c.b16 %v597, %v596
    %v609 = vpack.c.b16 %v599, %v598
    %v610 = vpack.c.b16 %v601, %v600
    %v611 = vpack.c.b16 %v603, %v602
    %620 = vmatpush.bf16.msra.mxu0 %v611
    %621 = vmatpush.bf16.msra.mxu0 %v610
    %622 = vmatpush.bf16.msra.mxu0 %v609
    %623 = vmatpush.bf16.msra.mxu0 %v608
    %624 = vmatpush.bf16.msra.mxu0 %v607
    %625 = vmatpush.bf16.msra.mxu0 %v606
    %626 = vmatpush.bf16.msra.mxu0 %v605
    %627 = vmatpush.bf16.msra.mxu0 %v604
    %628 = vmatmul.bf16.gmra.mxu0 %v555
    %v629 = vpop.f32.mrf.mxu0
    %v630 = vadd.f32 0.0, %v629
    %v631 = vpop.f32.mrf.mxu0
    %632 = vdwg.mxu0
    %v633 = vadd.f32 %v548, %v630
    %634 = vset.pattern.permute.xlu0 7
    %635 = vperm.xlu0 %634, %v34
    %v636 = vpop.permute.xlu0 %635
    %vm637 = vcmp.eq.s32.totalorder %v636, %v37
    %v638 = vsel %vm637, 1, 0
    %v639 = vcvt.s32.f32 %v638
    %v640 = vpack.c.bf16 %v639, %v639
    %v641 = vld [vmem:[#allocation2 + $0x1c0] sm:$0xf]
    %v642 = vld [vmem:[#allocation2 + $0x1c4] sm:$0xf]
    %v643 = vld [vmem:[#allocation2 + $0x1c8] sm:$0xf]
    %v644 = vld [vmem:[#allocation2 + $0x1cc] sm:$0xf]
    %v645 = vld [vmem:[#allocation2 + $0x1d0] sm:$0xf]
    %v646 = vld [vmem:[#allocation2 + $0x1d4] sm:$0xf]
    %v647 = vld [vmem:[#allocation2 + $0x1d8] sm:$0xf]
    %v648 = vld [vmem:[#allocation2 + $0x1dc] sm:$0xf]
    %v649 = vld [vmem:[#allocation2 + $0x1e0] sm:$0xf]
    %v650 = vld [vmem:[#allocation2 + $0x1e4] sm:$0xf]
    %v651 = vld [vmem:[#allocation2 + $0x1e8] sm:$0xf]
    %v652 = vld [vmem:[#allocation2 + $0x1ec] sm:$0xf]
    %v653 = vld [vmem:[#allocation2 + $0x1f0] sm:$0xf]
    %v654 = vld [vmem:[#allocation2 + $0x1f4] sm:$0xf]
    %v655 = vld [vmem:[#allocation2 + $0x1f8] sm:$0xf]
    %v656 = vld [vmem:[#allocation2 + $0x1fc] sm:$0xf]
    %v673 = vunpack.c.l.b16 %v641
    %v674 = vunpack.c.l.b16 %v642
    %v675 = vunpack.c.l.b16 %v643
    %v676 = vunpack.c.l.b16 %v644
    %v677 = vunpack.c.l.b16 %v645
    %v678 = vunpack.c.l.b16 %v646
    %v679 = vunpack.c.l.b16 %v647
    %v680 = vunpack.c.l.b16 %v648
    %v681 = vunpack.c.l.b16 %v649
    %v682 = vunpack.c.l.b16 %v650
    %v683 = vunpack.c.l.b16 %v651
    %v684 = vunpack.c.l.b16 %v652
    %v685 = vunpack.c.l.b16 %v653
    %v686 = vunpack.c.l.b16 %v654
    %v687 = vunpack.c.l.b16 %v655
    %v688 = vunpack.c.l.b16 %v656
    %v689 = vpack.c.b16 %v674, %v673
    %v690 = vpack.c.b16 %v676, %v675
    %v691 = vpack.c.b16 %v678, %v677
    %v692 = vpack.c.b16 %v680, %v679
    %v693 = vpack.c.b16 %v682, %v681
    %v694 = vpack.c.b16 %v684, %v683
    %v695 = vpack.c.b16 %v686, %v685
    %v696 = vpack.c.b16 %v688, %v687
    %705 = vmatpush.bf16.msra.mxu0 %v696
    %706 = vmatpush.bf16.msra.mxu0 %v695
    %707 = vmatpush.bf16.msra.mxu0 %v694
    %708 = vmatpush.bf16.msra.mxu0 %v693
    %709 = vmatpush.bf16.msra.mxu0 %v692
    %710 = vmatpush.bf16.msra.mxu0 %v691
    %711 = vmatpush.bf16.msra.mxu0 %v690
    %712 = vmatpush.bf16.msra.mxu0 %v689
    %713 = vmatmul.bf16.gmra.mxu0 %v640
    %v714 = vpop.f32.mrf.mxu0
    %v715 = vadd.f32 0.0, %v714
    %v716 = vpop.f32.mrf.mxu0
    %717 = vdwg.mxu0
    %v718 = vadd.f32 %v633, %v715
    %v719 = vmax.f32 %v718, 0.0
    %v720 = vperm.slane %v35, 1
    %v721 = vld [vmem:[%s3] sm:$0xff]
    %v722 = vld [vmem:[%s3 + $0x8] sm:$0xff]
    %v723 = vld [vmem:[%s3 + $0x10] sm:$0xff]
    %v724 = vld [vmem:[%s3 + $0x18] sm:$0xff]
    %v725 = vld [vmem:[%s3 + $0x20] sm:$0xff]
    %v726 = vld [vmem:[%s3 + $0x28] sm:$0xff]
    %v727 = vld [vmem:[%s3 + $0x30] sm:$0xff]
    %v728 = vld [vmem:[%s3 + $0x38] sm:$0xff]
    %v729 = vld [vmem:[%s3 + $0x40] sm:$0xff]
    %v730 = vld [vmem:[%s3 + $0x48] sm:$0xff]
    %v731 = vld [vmem:[%s3 + $0x50] sm:$0xff]
    %v732 = vld [vmem:[%s3 + $0x58] sm:$0xff]
    %v733 = vld [vmem:[%s3 + $0x60] sm:$0xff]
    %v734 = vld [vmem:[%s3 + $0x68] sm:$0xff]
    %v735 = vld [vmem:[%s3 + $0x70] sm:$0xff]
    %v736 = vld [vmem:[%s3 + $0x78] sm:$0xff]
    %737 = vmatpush.msra.mxu0 %v736
    %738 = vmatpush.msra.mxu0 %v735
    %739 = vmatpush.msra.mxu0 %v734
    %740 = vmatpush.msra.mxu0 %v733
    %741 = vmatpush.msra.mxu0 %v732
    %742 = vmatpush.msra.mxu0 %v731
    %743 = vmatpush.msra.mxu0 %v730
    %744 = vmatpush.msra.mxu0 %v729
    %745 = vmatpush.msra.mxu0 %v728
    %746 = vmatpush.msra.mxu0 %v727
    %747 = vmatpush.msra.mxu0 %v726
    %748 = vmatpush.msra.mxu0 %v725
    %749 = vmatpush.msra.mxu0 %v724
    %750 = vmatpush.msra.mxu0 %v723
    %751 = vmatpush.msra.mxu0 %v722
    %752 = vmatpush.msra.mxu0 %v721
    %753 = vmatmul.f32.gmra.mxu0 %v719
    %v754 = vpop.f32.mrf.mxu0
    %v755 = vadd.f32 0.0, %v754
    %756 = vdwg.mxu0
    %v757 = vadd.f32 %v720, %v755
    %vm758 = vcmask 64512
    %759 = vst.msk [vmem:[#allocation5] sm:$0xff] %vm758, %v757
    // Predicated region
    $region22: #{tpu_custom_call.1} parent=1 // pred_check
      _
    $region23: #{tpu_custom_call.1} parent=1 // pred_check_branch
      %761 = sbr.rel (0) target = $region25
    $region24: #{tpu_custom_call.1} parent=1 // pred_region
      %763 = vsyncadd [#allocation4], 0
      %s765 = sshll.u32 [#allocation5], 4
      %s766 = int_to_ptr.vmem [resolvable:$true] %s765
      %s767 = sshll.u32 %s4, 4
      %s768 = int_to_ptr.hbm [resolvable:$true] %s767
      %770 = dma.vmem_to_hbm [thread:$0]  %s766, 128, %s768, [#allocation4]
    $region25: #{tpu_custom_call.1} parent=1 // pred_fallthru
      _
    // Predicated region
    $region26: #{tpu_custom_call.1} parent=1 // pred_check
      _
    $region27: #{tpu_custom_call.1} parent=1 // pred_check_branch
      %772 = sbr.rel (0) target = $region29
    $region28: #{tpu_custom_call.1} parent=1 // pred_region
      %774 = dma.done [#allocation4], 128
    $region29: #{tpu_custom_call.1} parent=1 // pred_fallthru
      _
    %775 = vsyncpa [#allocation3], 1
    %776 = vsyncpa [#allocation4], 1

</llo_original>
